<compile_context>
chip_gen: v6e
topology: v6e:2x2x1
jax: 0.10.0
libtpu: 0.0.40
codegen_flags: <defaults>
</compile_context>

<pallas_src>
import functools

import jax
import jax.numpy as jnp
from jax.experimental import pallas as pl
from jax.experimental.pallas import tpu as pltpu


def _round_up(n, m):
    return ((n + m - 1) // m) * m


def actor_kernel(x_ref,
                 w1_ref, b1_ref,
                 w2_ref, b2_ref,
                 w3_ref, b3_ref,
                 wh_ref, bh_ref,
                 out_ref, *, action_dim):
    cdt = w1_ref.dtype  # bf16: MXU input dtype; accumulation stays f32.

    x = x_ref[...].astype(cdt)

    # fc1 + relu
    h = jnp.dot(x, w1_ref[...], preferred_element_type=jnp.float32) + b1_ref[...]
    h = jnp.maximum(h, 0.0)

    # fc2 + relu
    h = jnp.dot(h.astype(cdt), w2_ref[...], preferred_element_type=jnp.float32) + b2_ref[...]
    h = jnp.maximum(h, 0.0)

    # fc3 + relu
    h = jnp.dot(h.astype(cdt), w3_ref[...], preferred_element_type=jnp.float32) + b3_ref[...]
    h = jnp.maximum(h, 0.0)

    # Fused, lane-padded heads: columns [0, A) = mean, [A, 2A) = log_std,
    # [2A, 128) = zero padding (never clamped, written back as-is).
    heads = jnp.dot(h.astype(cdt), wh_ref[...], preferred_element_type=jnp.float32) + bh_ref[...]

    col = jax.lax.broadcasted_iota(jnp.int32, heads.shape, 1)
    is_log_std = (col >= action_dim) & (col < 2 * action_dim)
    out = jnp.where(is_log_std, jnp.clip(heads, -20.0, 2.0), heads)

    out_ref[...] = out.astype(out_ref.dtype)


@functools.partial(jax.jit, static_argnames=("action_dim", "tm"))
def actor_forward(x, packed, *, action_dim, tm=512):
    """x: [B, lidar_dim] float32.  packed: output of pack_actor_params.
    Returns (mean, log_std), each [B, action_dim] f32."""
    B, lidar_dim = x.shape
    nh = packed["wh"].shape[1]  # lane-padded head width (multiple of 128)

    # Batch tiling: tm clamped to a multiple of 8; split the batch into >= 2
    # tiles whenever possible so the "parallel" grid axis shards across v7x's
    # two TensorCores (and keeps per-step tiles reasonable for big v6e batches).
    tm = max(8, _round_up(tm, 8))
    half = _round_up(max(1, (B + 1) // 2), 8)
    block_m = min(tm, half)
    Bp = _round_up(B, block_m)
    x_p = jnp.pad(x, ((0, Bp - B), (0, 0))) if Bp != B else x

    operands = (
        x_p,
        packed["w1"], packed["b1"],
        packed["w2"], packed["b2"],
        packed["w3"], packed["b3"],
        packed["wh"], packed["bh"],
    )

    # x / output are tiled along the batch axis; all weights & biases are
    # full-array blocks with a constant index_map (resident across grid steps).
    in_specs = [pl.BlockSpec((block_m, lidar_dim), lambda i: (i, 0))] + [
        pl.BlockSpec(op.shape, lambda i: (0, 0)) for op in operands[1:]
    ]
    out_specs = pl.BlockSpec((block_m, nh), lambda i: (i, 0))

    out = pl.pallas_call(
        functools.partial(actor_kernel, action_dim=action_dim),
        out_shape=jax.ShapeDtypeStruct((Bp, nh), jnp.float32),
        grid=(Bp // block_m,),
        in_specs=in_specs,
        out_specs=out_specs,
        compiler_params=pltpu.CompilerParams(
            dimension_semantics=("parallel",)),
    )(*operands)

    # Single narrow slice of the valid rows/columns, then split; under jit the
    # two column views fuse into one downstream op.
    head = jax.lax.slice(out, (0, 0), (B, 2 * action_dim))
    return head[:, :action_dim], head[:, action_dim:]


def init_actor_params(key, lidar_dim, action_dim=2, hidden_dim=256,
                      weight_dtype=jnp.bfloat16):
    """Init mirroring PyTorch nn.Linear default U(-1/sqrt(fan_in), 1/sqrt(fan_in)).
    Weights are stored [in, out] (transposed vs. PyTorch) in bf16; biases in f32."""
    def linear(k, fan_in, fan_out):
        kw, kb = jax.random.split(k)
        bound = 1.0 / jnp.sqrt(fan_in)
        w = jax.random.uniform(kw, (fan_in, fan_out), jnp.float32, -bound, bound)
        b = jax.random.uniform(kb, (1, fan_out), jnp.float32, -bound, bound)
        return w.astype(weight_dtype), b

    k1, k2, k3, k4, k5 = jax.random.split(key, 5)
    w1, b1 = linear(k1, lidar_dim, hidden_dim)
    w2, b2 = linear(k2, hidden_dim, hidden_dim)
    w3, b3 = linear(k3, hidden_dim, hidden_dim)
    wm, bm = linear(k4, hidden_dim, action_dim)
    ws, bs = linear(k5, hidden_dim, action_dim)
    return {"w1": w1, "b1": b1, "w2": w2, "b2": b2, "w3": w3, "b3": b3,
            "wm": wm, "bm": bm, "ws": ws, "bs": bs}


def pack_actor_params(params, *, head_lanes=128):
    """One-time packing for the kernel: fuse (mean | log_std) head weights and
    zero-pad them to a lane-dense (multiple-of-128) output width."""
    hidden, action_dim = params["wm"].shape
    nh = _round_up(max(2 * action_dim, head_lanes), head_lanes)

    wdt = params["wm"].dtype
    wh = jnp.zeros((hidden, nh), wdt)
    wh = wh.at[:, :action_dim].set(params["wm"])
    wh = wh.at[:, action_dim:2 * action_dim].set(params["ws"])

    bh = jnp.zeros((1, nh), jnp.float32)
    bh = bh.at[:, :action_dim].set(params["bm"])
    bh = bh.at[:, action_dim:2 * action_dim].set(params["bs"])

    packed = {k: params[k] for k in ("w1", "b1", "w2", "b2", "w3", "b3")}
    packed["wh"] = wh
    packed["bh"] = bh
    return packed


def actor_forward_ref(x, params):
    """Pure-JAX reference with identical numerics (bf16 matmul inputs, f32 accum)."""
    cdt = params["w1"].dtype

    def mm(a, w):
        return jnp.dot(a.astype(cdt), w, preferred_element_type=jnp.float32)

    h = jax.nn.relu(mm(x, params["w1"]) + params["b1"])
    h = jax.nn.relu(mm(h, params["w2"]) + params["b2"])
    h = jax.nn.relu(mm(h, params["w3"]) + params["b3"])
    mean = mm(h, params["wm"]) + params["bm"]
    log_std = jnp.clip(mm(h, params["ws"]) + params["bs"], -20.0, 2.0)
    return mean, log_std


# TODO(synk): Actor.sample() (rsample + tanh squash + log_prob) is not part of
# forward(); it needs Gaussian sampling and is intentionally left out of the kernel.

if __name__ == "__main__":
    key = jax.random.PRNGKey(0)
    k_in, k_params, k_in2, k_params2 = jax.random.split(key, 4)

    # Small shapes consistent with the module.
    lidar_dim, action_dim, hidden_dim, batch = 32, 2, 32, 8
    x = jax.random.normal(k_in, (batch, lidar_dim), dtype=jnp.float32)
    params = init_actor_params(k_params, lidar_dim, action_dim, hidden_dim)
    packed = pack_actor_params(params)   # one-time packing (not per forward)

    mean, log_std = actor_forward(x, packed, action_dim=action_dim)
    jax.block_until_ready((mean, log_std))

    mean_ref, log_std_ref = actor_forward_ref(x, params)
    assert mean.shape == (batch, action_dim) and log_std.shape == (batch, action_dim)
    assert jnp.allclose(mean, mean_ref, atol=1e-3, rtol=1e-3)
    assert jnp.allclose(log_std, log_std_ref, atol=1e-3, rtol=1e-3)
    assert jnp.all(log_std <= 2.0) and jnp.all(log_std >= -20.0)

    # Exercise the multi-step (grid = 2, padded-batch) path at realistic sizes.
    x2 = jax.random.normal(k_in2, (200, 64), dtype=jnp.float32)
    params2 = init_actor_params(k_params2, 64, action_dim, 256)
    packed2 = pack_actor_params(params2)
    mean2, log_std2 = actor_forward(x2, packed2, action_dim=action_dim)
    jax.block_until_ready((mean2, log_std2))
    mean2_ref, log_std2_ref = actor_forward_ref(x2, params2)
    assert jnp.allclose(mean2, mean2_ref, atol=1e-3, rtol=1e-3)
    assert jnp.allclose(log_std2, log_std2_ref, atol=1e-3, rtol=1e-3)

    print("KERNEL_OK")
</pallas_src>

<mosaic_0001>
module attributes {stable_mosaic.version = 11 : i64} {
  func.func @actor_kernel(%arg0: i32, %arg1: memref<8x32xf32, #tpu.memory_space<vmem>>, %arg2: memref<32x32xbf16, #tpu.memory_space<vmem>>, %arg3: memref<1x32xf32, #tpu.memory_space<vmem>>, %arg4: memref<32x32xbf16, #tpu.memory_space<vmem>>, %arg5: memref<1x32xf32, #tpu.memory_space<vmem>>, %arg6: memref<32x32xbf16, #tpu.memory_space<vmem>>, %arg7: memref<1x32xf32, #tpu.memory_space<vmem>>, %arg8: memref<32x128xbf16, #tpu.memory_space<vmem>>, %arg9: memref<1x128xf32, #tpu.memory_space<vmem>>, %arg10: memref<8x128xf32, #tpu.memory_space<vmem>>) attributes {dimension_semantics = [#tpu.dimension_semantics<parallel>], iteration_bounds = array<i64: 1>, scalar_prefetch = 0 : i64, scratch_operands = 0 : i64, tpu.core_type = #tpu.core_type<tc>, window_params = [{transform_indices = @transform_0, window_bounds = array<i64: 8, 32>}, {pipeline_mode = #tpu.pipeline_mode<synchronous>, transform_indices = @transform_1, window_bounds = array<i64: 32, 32>}, {pipeline_mode = #tpu.pipeline_mode<synchronous>, transform_indices = @transform_2, window_bounds = array<i64: 1, 32>}, {pipeline_mode = #tpu.pipeline_mode<synchronous>, transform_indices = @transform_3, window_bounds = array<i64: 32, 32>}, {pipeline_mode = #tpu.pipeline_mode<synchronous>, transform_indices = @transform_4, window_bounds = array<i64: 1, 32>}, {pipeline_mode = #tpu.pipeline_mode<synchronous>, transform_indices = @transform_5, window_bounds = array<i64: 32, 32>}, {pipeline_mode = #tpu.pipeline_mode<synchronous>, transform_indices = @transform_6, window_bounds = array<i64: 1, 32>}, {pipeline_mode = #tpu.pipeline_mode<synchronous>, transform_indices = @transform_7, window_bounds = array<i64: 32, 128>}, {pipeline_mode = #tpu.pipeline_mode<synchronous>, transform_indices = @transform_8, window_bounds = array<i64: 1, 128>}, {transform_indices = @transform_9, window_bounds = array<i64: 8, 128>}]} {
    %c0 = arith.constant 0 : index
    %c0_0 = arith.constant 0 : index
    %0 = vector.load %arg1[%c0, %c0_0] : memref<8x32xf32, #tpu.memory_space<vmem>>, vector<8x32xf32>
    %1 = arith.truncf %0 : vector<8x32xf32> to vector<8x32xbf16>
    %c0_1 = arith.constant 0 : index
    %c0_2 = arith.constant 0 : index
    %2 = vector.load %arg2[%c0_1, %c0_2] : memref<32x32xbf16, #tpu.memory_space<vmem>>, vector<32x32xbf16>
    %cst = arith.constant dense<0.000000e+00> : vector<8x32xf32>
    %3 = tpu.matmul %1, %2, %cst {dimension_numbers = #tpu.dot_dimension_numbers<[1], [0], [0], [1], [0, 0, 1, 1], [], []>} : vector<8x32xbf16>, vector<32x32xbf16>, vector<8x32xf32> -> vector<8x32xf32>
    %c0_3 = arith.constant 0 : index
    %c0_4 = arith.constant 0 : index
    %4 = vector.load %arg3[%c0_3, %c0_4] : memref<1x32xf32, #tpu.memory_space<vmem>>, vector<1x32xf32>
    %5 = vector.broadcast %4 : vector<1x32xf32> to vector<8x32xf32>
    %6 = arith.addf %3, %5 : vector<8x32xf32>
    %cst_5 = arith.constant 0.000000e+00 : f32
    %7 = vector.broadcast %cst_5 : f32 to vector<8x32xf32>
    %8 = arith.maximumf %6, %7 : vector<8x32xf32>
    %9 = arith.truncf %8 : vector<8x32xf32> to vector<8x32xbf16>
    %c0_6 = arith.constant 0 : index
    %c0_7 = arith.constant 0 : index
    %10 = vector.load %arg4[%c0_6, %c0_7] : memref<32x32xbf16, #tpu.memory_space<vmem>>, vector<32x32xbf16>
    %cst_8 = arith.constant dense<0.000000e+00> : vector<8x32xf32>
    %11 = tpu.matmul %9, %10, %cst_8 {dimension_numbers = #tpu.dot_dimension_numbers<[1], [0], [0], [1], [0, 0, 1, 1], [], []>} : vector<8x32xbf16>, vector<32x32xbf16>, vector<8x32xf32> -> vector<8x32xf32>
    %c0_9 = arith.constant 0 : index
    %c0_10 = arith.constant 0 : index
    %12 = vector.load %arg5[%c0_9, %c0_10] : memref<1x32xf32, #tpu.memory_space<vmem>>, vector<1x32xf32>
    %13 = vector.broadcast %12 : vector<1x32xf32> to vector<8x32xf32>
    %14 = arith.addf %11, %13 : vector<8x32xf32>
    %cst_11 = arith.constant 0.000000e+00 : f32
    %15 = vector.broadcast %cst_11 : f32 to vector<8x32xf32>
    %16 = arith.maximumf %14, %15 : vector<8x32xf32>
    %17 = arith.truncf %16 : vector<8x32xf32> to vector<8x32xbf16>
    %c0_12 = arith.constant 0 : index
    %c0_13 = arith.constant 0 : index
    %18 = vector.load %arg6[%c0_12, %c0_13] : memref<32x32xbf16, #tpu.memory_space<vmem>>, vector<32x32xbf16>
    %cst_14 = arith.constant dense<0.000000e+00> : vector<8x32xf32>
    %19 = tpu.matmul %17, %18, %cst_14 {dimension_numbers = #tpu.dot_dimension_numbers<[1], [0], [0], [1], [0, 0, 1, 1], [], []>} : vector<8x32xbf16>, vector<32x32xbf16>, vector<8x32xf32> -> vector<8x32xf32>
    %c0_15 = arith.constant 0 : index
    %c0_16 = arith.constant 0 : index
    %20 = vector.load %arg7[%c0_15, %c0_16] : memref<1x32xf32, #tpu.memory_space<vmem>>, vector<1x32xf32>
    %21 = vector.broadcast %20 : vector<1x32xf32> to vector<8x32xf32>
    %22 = arith.addf %19, %21 : vector<8x32xf32>
    %cst_17 = arith.constant 0.000000e+00 : f32
    %23 = vector.broadcast %cst_17 : f32 to vector<8x32xf32>
    %24 = arith.maximumf %22, %23 : vector<8x32xf32>
    %25 = arith.truncf %24 : vector<8x32xf32> to vector<8x32xbf16>
    %c0_18 = arith.constant 0 : index
    %c0_19 = arith.constant 0 : index
    %26 = vector.load %arg8[%c0_18, %c0_19] : memref<32x128xbf16, #tpu.memory_space<vmem>>, vector<32x128xbf16>
    %cst_20 = arith.constant dense<0.000000e+00> : vector<8x128xf32>
    %27 = tpu.matmul %25, %26, %cst_20 {dimension_numbers = #tpu.dot_dimension_numbers<[1], [0], [0], [1], [0, 0, 1, 1], [], []>} : vector<8x32xbf16>, vector<32x128xbf16>, vector<8x128xf32> -> vector<8x128xf32>
    %c0_21 = arith.constant 0 : index
    %c0_22 = arith.constant 0 : index
    %28 = vector.load %arg9[%c0_21, %c0_22] : memref<1x128xf32, #tpu.memory_space<vmem>>, vector<1x128xf32>
    %29 = vector.broadcast %28 : vector<1x128xf32> to vector<8x128xf32>
    %30 = arith.addf %27, %29 : vector<8x128xf32>
    %31 = tpu.iota {dimensions = array<i32: 1>} : vector<8x128xi32>
    %c2_i32 = arith.constant 2 : i32
    %32 = vector.broadcast %c2_i32 : i32 to vector<8x128xi32>
    %33 = arith.cmpi sge, %31, %32 : vector<8x128xi32>
    %c4_i32 = arith.constant 4 : i32
    %34 = vector.broadcast %c4_i32 : i32 to vector<8x128xi32>
    %35 = arith.cmpi slt, %31, %34 : vector<8x128xi32>
    %36 = arith.andi %33, %35 : vector<8x128xi1>
    %cst_23 = arith.constant -2.000000e+01 : f32
    %cst_24 = arith.constant 2.000000e+00 : f32
    %37 = vector.broadcast %cst_23 : f32 to vector<8x128xf32>
    %38 = arith.maximumf %37, %30 : vector<8x128xf32>
    %39 = vector.broadcast %cst_24 : f32 to vector<8x128xf32>
    %40 = arith.minimumf %39, %38 : vector<8x128xf32>
    %41 = arith.select %36, %40, %30 : vector<8x128xi1>, vector<8x128xf32>
    %c0_25 = arith.constant 0 : index
    %c0_26 = arith.constant 0 : index
    %42 = vector.load %arg10[%c0_25, %c0_26] : memref<8x128xf32, #tpu.memory_space<vmem>>, vector<8x128xf32>
    tpu.vector_store %arg10[%c0_25, %c0_26], %41 {strides = array<i32>} : memref<8x128xf32, #tpu.memory_space<vmem>>, vector<8x128xf32>,
    return
  }
  func.func @transform_0(%arg0: i32) -> (i32, i32) {
    %c0_i32 = arith.constant 0 : i32
    %c0_i32_0 = arith.constant 0 : i32
    return %arg0, %c0_i32 : i32, i32
  }
  func.func @transform_1(%arg0: i32) -> (i32, i32) {
    %c0_i32 = arith.constant 0 : i32
    %c0_i32_0 = arith.constant 0 : i32
    %c0_i32_1 = arith.constant 0 : i32
    return %c0_i32, %c0_i32_0 : i32, i32
  }
  func.func @transform_2(%arg0: i32) -> (i32, i32) {
    %c0_i32 = arith.constant 0 : i32
    %c0_i32_0 = arith.constant 0 : i32
    %c0_i32_1 = arith.constant 0 : i32
    return %c0_i32, %c0_i32_0 : i32, i32
  }
  func.func @transform_3(%arg0: i32) -> (i32, i32) {
    %c0_i32 = arith.constant 0 : i32
    %c0_i32_0 = arith.constant 0 : i32
    %c0_i32_1 = arith.constant 0 : i32
    return %c0_i32, %c0_i32_0 : i32, i32
  }
  func.func @transform_4(%arg0: i32) -> (i32, i32) {
    %c0_i32 = arith.constant 0 : i32
    %c0_i32_0 = arith.constant 0 : i32
    %c0_i32_1 = arith.constant 0 : i32
    return %c0_i32, %c0_i32_0 : i32, i32
  }
  func.func @transform_5(%arg0: i32) -> (i32, i32) {
    %c0_i32 = arith.constant 0 : i32
    %c0_i32_0 = arith.constant 0 : i32
    %c0_i32_1 = arith.constant 0 : i32
    return %c0_i32, %c0_i32_0 : i32, i32
  }
  func.func @transform_6(%arg0: i32) -> (i32, i32) {
    %c0_i32 = arith.constant 0 : i32
    %c0_i32_0 = arith.constant 0 : i32
    %c0_i32_1 = arith.constant 0 : i32
    return %c0_i32, %c0_i32_0 : i32, i32
  }
  func.func @transform_7(%arg0: i32) -> (i32, i32) {
    %c0_i32 = arith.constant 0 : i32
    %c0_i32_0 = arith.constant 0 : i32
    %c0_i32_1 = arith.constant 0 : i32
    return %c0_i32, %c0_i32_0 : i32, i32
  }
  func.func @transform_8(%arg0: i32) -> (i32, i32) {
    %c0_i32 = arith.constant 0 : i32
    %c0_i32_0 = arith.constant 0 : i32
    %c0_i32_1 = arith.constant 0 : i32
    return %c0_i32, %c0_i32_0 : i32, i32
  }
  func.func @transform_9(%arg0: i32) -> (i32, i32) {
    %c0_i32 = arith.constant 0 : i32
    %c0_i32_0 = arith.constant 0 : i32
    return %arg0, %c0_i32 : i32, i32
  }
}

</mosaic_0001>

<llo_original>
// kernel: actor_forward.1
$region0: #{actor_forward.1}
  #allocation0 [shape = 'u32[]', space=smem, size = 0x4, offset = 0x4, fixed_abs, tag = 'smem constant byte address 0x4 - core index']
  #allocation1 [shape = 'u32[144,128]{1,0:T(1,128)}', space=vmem, size = 0x12000, scoped, tag = 'internal scratch']
  %s0 = inlined_call_operand.hbm [shape: f32[8,32], index: 0, kind: input, shape index: {}]
  %s1 = inlined_call_operand.hbm [shape: bf16[32,32], index: 1, kind: input, shape index: {}]
  %s2 = inlined_call_operand.vmem [shape: f32[1,32], index: 2, kind: input, shape index: {}]
  %s3 = inlined_call_operand.hbm [shape: bf16[32,32], index: 3, kind: input, shape index: {}]
  %s4 = inlined_call_operand.vmem [shape: f32[1,32], index: 4, kind: input, shape index: {}]
  %s5 = inlined_call_operand.hbm [shape: bf16[32,32], index: 5, kind: input, shape index: {}]
  %s6 = inlined_call_operand.vmem [shape: f32[1,32], index: 6, kind: input, shape index: {}]
  %s7 = inlined_call_operand.hbm [shape: bf16[32,128], index: 7, kind: input, shape index: {}]
  %s8 = inlined_call_operand.vmem [shape: f32[1,128], index: 8, kind: input, shape index: {}]
  %s9 = inlined_call_operand.vmem [shape: f32[8,128], index: 9, kind: output, shape index: {}]
  %s10 = sld [smem:[#allocation0]]
  $region66: #{actor_forward.1} parent=0
    _
  %s12 = ssub.s32 1, %s10
  %s13 = scalar_select 0, %s12, %s10
  $region1: #{actor_forward.1} parent=0
    #allocation2 [shape = 'u8[4096]{0}', space=vmem, size = 0x1000, scoped, tag = 'input window, operand 0, single buffered']
    #allocation3 [shape = 's32[1]{0}', space=sflag, size = 0x4, scoped, tag = 'scoped memory for actor_forward.1']
    #allocation4 [shape = 'u8[8192]{0}', space=vmem, size = 0x2000, scoped, tag = 'input window, operand 1, single buffered']
    #allocation5 [shape = 's32[1]{0}', space=sflag, size = 0x4, scoped, tag = 'scoped memory for actor_forward.1']
    #allocation6 [shape = 'u8[8192]{0}', space=vmem, size = 0x2000, scoped, tag = 'input window, operand 3, single buffered']
    #allocation7 [shape = 'u8[8192]{0}', space=vmem, size = 0x2000, scoped, tag = 'input window, operand 5, single buffered']
    #allocation8 [shape = 's32[1]{0}', space=sflag, size = 0x4, scoped, tag = 'scoped memory for actor_forward.1']
    #allocation9 [shape = 'u8[8192]{0}', space=vmem, size = 0x2000, scoped, tag = 'input window, operand 7, single buffered']
    %14 = vsyncpa [#allocation3], 0
    %15 = vsyncpa [#allocation5], 0
    %16 = vsyncpa [#allocation8], 0
    // Predicated region
    $region2: #{actor_forward.1} parent=1 // pred_check
      _
    $region3: #{actor_forward.1} parent=1 // pred_check_branch
      %18 = sbr.rel (0) target = $region5
    $region4: #{actor_forward.1} parent=1 // pred_region
      %s20 = ssub.s32 128, 128
      %21 = vsyncadd [#allocation3], %s20
      %s23 = sshll.u32 [#allocation2], 4
      %s24 = int_to_ptr.vmem [resolvable:$true] %s23
      %26 = dma.hbm_to_vmem [thread:$0]  %s0, 128, %s24, [#allocation3]
    $region5: #{actor_forward.1} parent=1 // pred_fallthru
      _
    // Predicated region
    $region6: #{actor_forward.1} parent=1 // pred_check
      _
    $region7: #{actor_forward.1} parent=1 // pred_check_branch
      %28 = sbr.rel (0) target = $region9
    $region8: #{actor_forward.1} parent=1 // pred_region
      %s30 = ssub.s32 256, 256
      %31 = vsyncadd [#allocation5], %s30
      %s32 = sshll.u32 [#allocation4], 4
      %s33 = int_to_ptr.vmem [resolvable:$true] %s32
      %38 = dma.hbm_to_vmem [thread:$0]  %s1, 256, %s33, [#allocation5], 64, 64, 4
    $region9: #{actor_forward.1} parent=1 // pred_fallthru
      _
    // Predicated region
    $region10: #{actor_forward.1} parent=1 // pred_check
      _
    $region11: #{actor_forward.1} parent=1 // pred_check_branch
      %40 = sbr.rel (0) target = $region13
    $region12: #{actor_forward.1} parent=1 // pred_region
      _
    $region13: #{actor_forward.1} parent=1 // pred_fallthru
      _
    // Predicated region
    $region14: #{actor_forward.1} parent=1 // pred_check
      _
    $region15: #{actor_forward.1} parent=1 // pred_check_branch
      %42 = sbr.rel (0) target = $region17
    $region16: #{actor_forward.1} parent=1 // pred_region
      %s44 = ssub.s32 256, 256
      %45 = vsyncadd [#allocation5], %s44
      %s46 = sshll.u32 [#allocation6], 4
      %s47 = int_to_ptr.vmem [resolvable:$true] %s46
      %52 = dma.hbm_to_vmem [thread:$0]  %s3, 256, %s47, [#allocation5], 64, 64, 4
    $region17: #{actor_forward.1} parent=1 // pred_fallthru
      _
    // Predicated region
    $region18: #{actor_forward.1} parent=1 // pred_check
      _
    $region19: #{actor_forward.1} parent=1 // pred_check_branch
      %54 = sbr.rel (0) target = $region21
    $region20: #{actor_forward.1} parent=1 // pred_region
      _
    $region21: #{actor_forward.1} parent=1 // pred_fallthru
      _
    // Predicated region
    $region22: #{actor_forward.1} parent=1 // pred_check
      _
    $region23: #{actor_forward.1} parent=1 // pred_check_branch
      %56 = sbr.rel (0) target = $region25
    $region24: #{actor_forward.1} parent=1 // pred_region
      %s58 = ssub.s32 256, 256
      %59 = vsyncadd [#allocation8], %s58
      %s60 = sshll.u32 [#allocation7], 4
      %s61 = int_to_ptr.vmem [resolvable:$true] %s60
      %66 = dma.hbm_to_vmem [thread:$0]  %s5, 256, %s61, [#allocation8], 64, 64, 4
    $region25: #{actor_forward.1} parent=1 // pred_fallthru
      _
    // Predicated region
    $region26: #{actor_forward.1} parent=1 // pred_check
      _
    $region27: #{actor_forward.1} parent=1 // pred_check_branch
      %68 = sbr.rel (0) target = $region29
    $region28: #{actor_forward.1} parent=1 // pred_region
      _
    $region29: #{actor_forward.1} parent=1 // pred_fallthru
      _
    // Predicated region
    $region30: #{actor_forward.1} parent=1 // pred_check
      _
    $region31: #{actor_forward.1} parent=1 // pred_check_branch
      %70 = sbr.rel (0) target = $region33
    $region32: #{actor_forward.1} parent=1 // pred_region
      %s72 = ssub.s32 256, 256
      %73 = vsyncadd [#allocation8], %s72
      %s74 = sshll.u32 [#allocation9], 4
      %s75 = int_to_ptr.vmem [resolvable:$true] %s74
      %80 = dma.hbm_to_vmem [thread:$0]  %s7, 256, %s75, [#allocation8], 64, 64, 4
    $region33: #{actor_forward.1} parent=1 // pred_fallthru
      _
    // Predicated region
    $region34: #{actor_forward.1} parent=1 // pred_check
      _
    $region35: #{actor_forward.1} parent=1 // pred_check_branch
      %82 = sbr.rel (0) target = $region37
    $region36: #{actor_forward.1} parent=1 // pred_region
      _
    $region37: #{actor_forward.1} parent=1 // pred_fallthru
      _
    // Predicated region
    $region38: #{actor_forward.1} parent=1 // pred_check
      _
    $region39: #{actor_forward.1} parent=1 // pred_check_branch
      %84 = sbr.rel (0) target = $region41
    $region40: #{actor_forward.1} parent=1 // pred_region
      %85 = dma.done [#allocation3], 128
    $region41: #{actor_forward.1} parent=1 // pred_fallthru
      _
    // Predicated region
    $region42: #{actor_forward.1} parent=1 // pred_check
      _
    $region43: #{actor_forward.1} parent=1 // pred_check_branch
      %87 = sbr.rel (0) target = $region45
    $region44: #{actor_forward.1} parent=1 // pred_region
      %88 = dma.done [#allocation5], 256
    $region45: #{actor_forward.1} parent=1 // pred_fallthru
      _
    // Predicated region
    $region46: #{actor_forward.1} parent=1 // pred_check
      _
    $region47: #{actor_forward.1} parent=1 // pred_check_branch
      %90 = sbr.rel (0) target = $region49
    $region48: #{actor_forward.1} parent=1 // pred_region
      %91 = dma.done [#allocation5], 256
    $region49: #{actor_forward.1} parent=1 // pred_fallthru
      _
    // Predicated region
    $region50: #{actor_forward.1} parent=1 // pred_check
      _
    $region51: #{actor_forward.1} parent=1 // pred_check_branch
      %93 = sbr.rel (0) target = $region53
    $region52: #{actor_forward.1} parent=1 // pred_region
      %94 = dma.done [#allocation8], 256
    $region53: #{actor_forward.1} parent=1 // pred_fallthru
      _
    // Predicated region
    $region54: #{actor_forward.1} parent=1 // pred_check
      _
    $region55: #{actor_forward.1} parent=1 // pred_check_branch
      %96 = sbr.rel (0) target = $region57
    $region56: #{actor_forward.1} parent=1 // pred_region
      %97 = dma.done [#allocation8], 256
    $region57: #{actor_forward.1} parent=1 // pred_fallthru
      _
    %v99 = vld [vmem:[#allocation2] sm:$0xff]
    %v100 = vpack.c.bf16 %v99, %v99
    %v101 = vld [vmem:[#allocation4] sm:$0xf]
    %v102 = vld [vmem:[#allocation4 + $0x4] sm:$0xf]
    %v103 = vld [vmem:[#allocation4 + $0x8] sm:$0xf]
    %v104 = vld [vmem:[#allocation4 + $0xc] sm:$0xf]
    %v105 = vld [vmem:[%s2] sm:$0x1]
    %v107 = vlaneseq
    %v108 = vshrl.u32 %v107, 7
    %v109 = vsub.s32 0, %v108
    %v110 = vrot.slane %v105, %v109
    %v116 = vunpack.c.l.b16 %v101
    %v117 = vunpack.c.l.b16 %v102
    %v118 = vunpack.c.l.b16 %v103
    %v119 = vunpack.c.l.b16 %v104
    %v120 = vpack.c.b16 %v117, %v116
    %v121 = vpack.c.b16 %v119, %v118
    %vm124 = vcmask 261120
    %v126 = vsel %vm124, %v100, 0
    %128 = vmatprep.subr.bf16.mxu0 0
    %129 = vmatpush1.bf16.msra.mxu0 0
    %130 = vmatprep.subr.bf16.mxu0 0
    %131 = vmatpush1.bf16.msra.mxu0 0
    %132 = vmatprep.subr.bf16.mxu0 0
    %133 = vmatpush1.bf16.msra.mxu0 0
    %134 = vmatprep.subr.bf16.mxu0 0
    %135 = vmatpush1.bf16.msra.mxu0 0
    %136 = vmatprep.subr.bf16.mxu0 0
    %137 = vmatpush1.bf16.msra.mxu0 0
    %138 = vmatprep.subr.bf16.mxu0 0
    %139 = vmatpush1.bf16.msra.mxu0 0
    %140 = vmatprep.subr.bf16.mxu0 0
    %141 = vmatpush1.bf16.msra.mxu0 %v121
    %142 = vmatprep.subr.bf16.mxu0 0
    %143 = vmatpush1.bf16.msra.mxu0 %v120
    %144 = vmatprep.subr.bf16.mxu0 0
    %145 = vmatpush2.bf16.msra.mxu0 0
    %146 = vmatprep.subr.bf16.mxu0 0
    %147 = vmatpush2.bf16.msra.mxu0 0
    %148 = vmatprep.subr.bf16.mxu0 0
    %149 = vmatpush2.bf16.msra.mxu0 0
    %150 = vmatprep.subr.bf16.mxu0 0
    %151 = vmatpush2.bf16.msra.mxu0 0
    %152 = vmatprep.subr.bf16.mxu0 0
    %153 = vmatpush2.bf16.msra.mxu0 0
    %154 = vmatprep.subr.bf16.mxu0 0
    %155 = vmatpush2.bf16.msra.mxu0 0
    %156 = vmatprep.subr.bf16.mxu0 0
    %157 = vmatpush2.bf16.msra.mxu0 0
    %158 = vmatprep.subr.bf16.mxu0 0
    %159 = vmatpush2.bf16.msra.mxu0 0
    %160 = vmatprep.mubr.bf16.mxu0 0
    %161 = vmatmul.mubr.bf16.gmra.mxu0 %v126
    %v162 = vpop.f32.mrf.mxu0
    %v163 = vadd.f32 %v110, %v162
    %v164 = vpop.f32.mrf.mxu0
    %v165 = vpop.f32.mrf.mxu0
    %v166 = vpop.f32.mrf.mxu0
    %167 = vdwg.mxu0
    %v168 = vmax.f32 %v163, 0.0
    %v169 = vpack.c.bf16 %v168, %v168
    %v170 = vld [vmem:[#allocation6] sm:$0xf]
    %v171 = vld [vmem:[#allocation6 + $0x4] sm:$0xf]
    %v172 = vld [vmem:[#allocation6 + $0x8] sm:$0xf]
    %v173 = vld [vmem:[#allocation6 + $0xc] sm:$0xf]
    %v174 = vld [vmem:[%s4] sm:$0x1]
    %v176 = vlaneseq
    %v177 = vshrl.u32 %v176, 7
    %v178 = vsub.s32 0, %v177
    %v179 = vrot.slane %v174, %v178
    %v185 = vunpack.c.l.b16 %v170
    %v186 = vunpack.c.l.b16 %v171
    %v187 = vunpack.c.l.b16 %v172
    %v188 = vunpack.c.l.b16 %v173
    %v189 = vpack.c.b16 %v186, %v185
    %v190 = vpack.c.b16 %v188, %v187
    %v194 = vsel %vm124, %v169, 0
    %196 = vmatprep.subr.bf16.mxu0 0
    %197 = vmatpush1.bf16.msra.mxu0 0
    %198 = vmatprep.subr.bf16.mxu0 0
    %199 = vmatpush1.bf16.msra.mxu0 0
    %200 = vmatprep.subr.bf16.mxu0 0
    %201 = vmatpush1.bf16.msra.mxu0 0
    %202 = vmatprep.subr.bf16.mxu0 0
    %203 = vmatpush1.bf16.msra.mxu0 0
    %204 = vmatprep.subr.bf16.mxu0 0
    %205 = vmatpush1.bf16.msra.mxu0 0
    %206 = vmatprep.subr.bf16.mxu0 0
    %207 = vmatpush1.bf16.msra.mxu0 0
    %208 = vmatprep.subr.bf16.mxu0 0
    %209 = vmatpush1.bf16.msra.mxu0 %v190
    %210 = vmatprep.subr.bf16.mxu0 0
    %211 = vmatpush1.bf16.msra.mxu0 %v189
    %212 = vmatprep.subr.bf16.mxu0 0
    %213 = vmatpush2.bf16.msra.mxu0 0
    %214 = vmatprep.subr.bf16.mxu0 0
    %215 = vmatpush2.bf16.msra.mxu0 0
    %216 = vmatprep.subr.bf16.mxu0 0
    %217 = vmatpush2.bf16.msra.mxu0 0
    %218 = vmatprep.subr.bf16.mxu0 0
    %219 = vmatpush2.bf16.msra.mxu0 0
    %220 = vmatprep.subr.bf16.mxu0 0
    %221 = vmatpush2.bf16.msra.mxu0 0
    %222 = vmatprep.subr.bf16.mxu0 0
    %223 = vmatpush2.bf16.msra.mxu0 0
    %224 = vmatprep.subr.bf16.mxu0 0
    %225 = vmatpush2.bf16.msra.mxu0 0
    %226 = vmatprep.subr.bf16.mxu0 0
    %227 = vmatpush2.bf16.msra.mxu0 0
    %228 = vmatprep.mubr.bf16.mxu0 0
    %229 = vmatmul.mubr.bf16.gmra.mxu0 %v194
    %v230 = vpop.f32.mrf.mxu0
    %v231 = vadd.f32 %v179, %v230
    %v232 = vpop.f32.mrf.mxu0
    %v233 = vpop.f32.mrf.mxu0
    %v234 = vpop.f32.mrf.mxu0
    %235 = vdwg.mxu0
    %v236 = vmax.f32 %v231, 0.0
    %v237 = vpack.c.bf16 %v236, %v236
    %v238 = vld [vmem:[#allocation7] sm:$0xf]
    %v239 = vld [vmem:[#allocation7 + $0x4] sm:$0xf]
    %v240 = vld [vmem:[#allocation7 + $0x8] sm:$0xf]
    %v241 = vld [vmem:[#allocation7 + $0xc] sm:$0xf]
    %v242 = vld [vmem:[%s6] sm:$0x1]
    %v244 = vlaneseq
    %v245 = vshrl.u32 %v244, 7
    %v246 = vsub.s32 0, %v245
    %v247 = vrot.slane %v242, %v246
    %v253 = vunpack.c.l.b16 %v238
    %v254 = vunpack.c.l.b16 %v239
    %v255 = vunpack.c.l.b16 %v240
    %v256 = vunpack.c.l.b16 %v241
    %v257 = vpack.c.b16 %v254, %v253
    %v258 = vpack.c.b16 %v256, %v255
    %v262 = vsel %vm124, %v237, 0
    %264 = vmatprep.subr.bf16.mxu0 0
    %265 = vmatpush1.bf16.msra.mxu0 0
    %266 = vmatprep.subr.bf16.mxu0 0
    %267 = vmatpush1.bf16.msra.mxu0 0
    %268 = vmatprep.subr.bf16.mxu0 0
    %269 = vmatpush1.bf16.msra.mxu0 0
    %270 = vmatprep.subr.bf16.mxu0 0
    %271 = vmatpush1.bf16.msra.mxu0 0
    %272 = vmatprep.subr.bf16.mxu0 0
    %273 = vmatpush1.bf16.msra.mxu0 0
    %274 = vmatprep.subr.bf16.mxu0 0
    %275 = vmatpush1.bf16.msra.mxu0 0
    %276 = vmatprep.subr.bf16.mxu0 0
    %277 = vmatpush1.bf16.msra.mxu0 %v258
    %278 = vmatprep.subr.bf16.mxu0 0
    %279 = vmatpush1.bf16.msra.mxu0 %v257
    %280 = vmatprep.subr.bf16.mxu0 0
    %281 = vmatpush2.bf16.msra.mxu0 0
    %282 = vmatprep.subr.bf16.mxu0 0
    %283 = vmatpush2.bf16.msra.mxu0 0
    %284 = vmatprep.subr.bf16.mxu0 0
    %285 = vmatpush2.bf16.msra.mxu0 0
    %286 = vmatprep.subr.bf16.mxu0 0
    %287 = vmatpush2.bf16.msra.mxu0 0
    %288 = vmatprep.subr.bf16.mxu0 0
    %289 = vmatpush2.bf16.msra.mxu0 0
    %290 = vmatprep.subr.bf16.mxu0 0
    %291 = vmatpush2.bf16.msra.mxu0 0
    %292 = vmatprep.subr.bf16.mxu0 0
    %293 = vmatpush2.bf16.msra.mxu0 0
    %294 = vmatprep.subr.bf16.mxu0 0
    %295 = vmatpush2.bf16.msra.mxu0 0
    %296 = vmatprep.mubr.bf16.mxu0 0
    %297 = vmatmul.mubr.bf16.gmra.mxu0 %v262
    %v298 = vpop.f32.mrf.mxu0
    %v299 = vadd.f32 %v247, %v298
    %v300 = vpop.f32.mrf.mxu0
    %v301 = vpop.f32.mrf.mxu0
    %v302 = vpop.f32.mrf.mxu0
    %303 = vdwg.mxu0
    %v304 = vmax.f32 %v299, 0.0
    %v305 = vpack.c.bf16 %v304, %v304
    %v306 = vld [vmem:[#allocation9] sm:$0xf]
    %v307 = vld [vmem:[#allocation9 + $0x4] sm:$0xf]
    %v308 = vld [vmem:[#allocation9 + $0x8] sm:$0xf]
    %v309 = vld [vmem:[#allocation9 + $0xc] sm:$0xf]
    %v310 = vld [vmem:[%s8] sm:$0x1]
    %v312 = vlaneseq
    %v313 = vshrl.u32 %v312, 7
    %v314 = vsub.s32 0, %v313
    %v315 = vrot.slane %v310, %v314
    %v321 = vunpack.c.l.b16 %v306
    %v322 = vunpack.c.l.b16 %v307
    %v323 = vunpack.c.l.b16 %v308
    %v324 = vunpack.c.l.b16 %v309
    %v325 = vpack.c.b16 %v322, %v321
    %v326 = vpack.c.b16 %v324, %v323
    %v330 = vsel %vm124, %v305, 0
    %332 = vmatprep.subr.bf16.mxu0 0
    %333 = vmatpush1.bf16.msra.mxu0 0
    %334 = vmatprep.subr.bf16.mxu0 0
    %335 = vmatpush1.bf16.msra.mxu0 0
    %336 = vmatprep.subr.bf16.mxu0 0
    %337 = vmatpush1.bf16.msra.mxu0 0
    %338 = vmatprep.subr.bf16.mxu0 0
    %339 = vmatpush1.bf16.msra.mxu0 0
    %340 = vmatprep.subr.bf16.mxu0 0
    %341 = vmatpush1.bf16.msra.mxu0 0
    %342 = vmatprep.subr.bf16.mxu0 0
    %343 = vmatpush1.bf16.msra.mxu0 0
    %344 = vmatprep.subr.bf16.mxu0 0
    %345 = vmatpush1.bf16.msra.mxu0 %v326
    %346 = vmatprep.subr.bf16.mxu0 0
    %347 = vmatpush1.bf16.msra.mxu0 %v325
    %348 = vmatprep.subr.bf16.mxu0 0
    %349 = vmatpush2.bf16.msra.mxu0 0
    %350 = vmatprep.subr.bf16.mxu0 0
    %351 = vmatpush2.bf16.msra.mxu0 0
    %352 = vmatprep.subr.bf16.mxu0 0
    %353 = vmatpush2.bf16.msra.mxu0 0
    %354 = vmatprep.subr.bf16.mxu0 0
    %355 = vmatpush2.bf16.msra.mxu0 0
    %356 = vmatprep.subr.bf16.mxu0 0
    %357 = vmatpush2.bf16.msra.mxu0 0
    %358 = vmatprep.subr.bf16.mxu0 0
    %359 = vmatpush2.bf16.msra.mxu0 0
    %360 = vmatprep.subr.bf16.mxu0 0
    %361 = vmatpush2.bf16.msra.mxu0 0
    %362 = vmatprep.subr.bf16.mxu0 0
    %363 = vmatpush2.bf16.msra.mxu0 0
    %364 = vmatprep.mubr.bf16.mxu0 0
    %365 = vmatmul.mubr.bf16.gmra.mxu0 %v330
    %v366 = vpop.f32.mrf.mxu0
    %v367 = vadd.f32 %v315, %v366
    %v368 = vpop.f32.mrf.mxu0
    %v369 = vpop.f32.mrf.mxu0
    %v370 = vpop.f32.mrf.mxu0
    %371 = vdwg.mxu0
    %v372 = vlaneseq
    %v373 = vand.u32 %v372, 127
    %vm374 = vcmp.ge.s32.totalorder %v373, 2
    %vm375 = vcmp.lt.s32.totalorder %v373, 4
    %vm376 = vmand %vm374, %vm375
    %v377 = vmax.f32 %v367, -20.0
    %v378 = vmin.f32 %v377, 2.0
    %v379 = vsel %vm376, %v378, %v367
    %380 = vst [vmem:[%s9] sm:$0xff] %v379
    // Predicated region
    $region58: #{actor_forward.1} parent=1 // pred_check
      _
    $region59: #{actor_forward.1} parent=1 // pred_check_branch
      %382 = sbr.rel (0) target = $region61
    $region60: #{actor_forward.1} parent=1 // pred_region
      _
    $region61: #{actor_forward.1} parent=1 // pred_fallthru
      _
    // Predicated region
    $region62: #{actor_forward.1} parent=1 // pred_check
      _
    $region63: #{actor_forward.1} parent=1 // pred_check_branch
      %384 = sbr.rel (0) target = $region65
    $region64: #{actor_forward.1} parent=1 // pred_region
      _
    $region65: #{actor_forward.1} parent=1 // pred_fallthru
      _
    %385 = vsyncpa [#allocation3], 1
    %386 = vsyncpa [#allocation5], 1
    %387 = vsyncpa [#allocation8], 1

</llo_original>
